<compile_context>
chip_gen: v6e
topology: v6e:2x2x1
jax: 0.10.0
libtpu: 0.0.40
codegen_flags: <defaults>
</compile_context>

<pallas_src>
import jax
import jax.numpy as jnp
from jax.experimental import pallas as pl
from jax.experimental.pallas import tpu as pltpu

K_IN = 4        # in_features of every weight in the dict
K_PAD = 8       # sublane-aligned contraction dim
N_PAD = 128     # lane-dense output width
B_MULT = 8      # sublane-aligned batch
_NAMES = ("linear1", "linear2", "linear3")


def _mm_kernel(choice_ref, x_ref, w_ref, o_ref):
    # choice_ref (SMEM scalar prefetch) is consumed by the index_maps only.
    del choice_ref
    o_ref[...] = jnp.dot(
        x_ref[...], w_ref[...], preferred_element_type=jnp.float32
    ).astype(o_ref.dtype)


@jax.jit
def _packed_mm(choice_idx: jax.Array, x: jax.Array, w_packed: jax.Array) -> jax.Array:
    """x: (B, K), w_packed: (n_slots, K_PAD, N_PAD), choice_idx: (1,) int32 -> (B, N_PAD)."""
    B, K = x.shape
    n_slots, kp, n_pad = w_packed.shape
    assert kp == K_PAD and n_pad == N_PAD and K <= K_PAD

    # Zero-pad x to a tile-aligned (Bp, K_PAD) slab; padded K rows of the weight
    # are also zero, so the matmul result over the valid columns is identical.
    pad_b = (-B) % B_MULT
    x_pad = jnp.pad(x, ((0, pad_b), (0, K_PAD - K)))
    Bp = B + pad_b

    y_pad = pl.pallas_call(
        _mm_kernel,
        out_shape=jax.ShapeDtypeStruct((Bp, N_PAD), x.dtype),
        grid_spec=pltpu.PrefetchScalarGridSpec(
            num_scalar_prefetch=1,          # choice_idx lives in SMEM
            grid=(1,),
            in_specs=[
                # full (tiny, tile-aligned) x block
                pl.BlockSpec((Bp, K_PAD), lambda i, c: (0, 0)),
                # weight slot chosen at runtime from the prefetched scalar;
                # leading dim squeezed away -> kernel sees (K_PAD, N_PAD)
                pl.BlockSpec((None, K_PAD, N_PAD), lambda i, c: (c[0], 0, 0)),
            ],
            out_specs=pl.BlockSpec((Bp, N_PAD), lambda i, c: (0, 0)),
        ),
        compiler_params=pltpu.CompilerParams(
            dimension_semantics=("arbitrary",),
        ),
    )(choice_idx, x_pad, w_packed)
    return y_pad[:B]


class MyDictDense:
    """JAX/Pallas port of the PyTorch MyDictDense module (single compiled kernel)."""

    def __init__(self, key: jax.Array):
        k1, k2, k3 = jax.random.split(key, 3)
        # Deterministic stand-ins for nn.Parameter(torch.randn(...)).
        self.params = {
            "linear1": jax.random.normal(k1, (4, 4), dtype=jnp.float32),
            "linear2": jax.random.normal(k2, (4, 1), dtype=jnp.float32),
            "linear3": jax.random.normal(k3, (4, 2), dtype=jnp.float32),
        }
        self._slot = {n: i for i, n in enumerate(_NAMES)}
        self._n_out = {n: self.params[n].shape[1] for n in _NAMES}

        # Pack weights: slots 0..2 = individual weights (zero-padded to
        # (K_PAD, N_PAD)), slot 3 = all three concatenated along N (for the
        # fused forward_all path).
        n_slots = len(_NAMES) + 1
        w_packed = jnp.zeros((n_slots, K_PAD, N_PAD), dtype=jnp.float32)
        for name in _NAMES:
            w = self.params[name]
            w_packed = w_packed.at[self._slot[name], : w.shape[0], : w.shape[1]].set(w)
        w_all = jnp.concatenate([self.params[n] for n in _NAMES], axis=1)
        self._fused_slot = len(_NAMES)
        w_packed = w_packed.at[
            self._fused_slot, : w_all.shape[0], : w_all.shape[1]
        ].set(w_all)
        self._w_packed = w_packed

        # Column offsets of each weight inside the fused slot.
        self._fused_offsets = {}
        off = 0
        for name in _NAMES:
            self._fused_offsets[name] = off
            off += self._n_out[name]

    def __call__(self, x: jax.Array, choice: str = "linear1") -> jax.Array:
        idx = jnp.array([self._slot[choice]], dtype=jnp.int32)
        y_pad = _packed_mm(idx, x, self._w_packed)
        return y_pad[:, : self._n_out[choice]]

    def forward_all(self, x: jax.Array) -> dict:
        """All three choices with one kernel launch (shared x)."""
        idx = jnp.array([self._fused_slot], dtype=jnp.int32)
        y_pad = _packed_mm(idx, x, self._w_packed)
        out = {}
        for name in _NAMES:
            off = self._fused_offsets[name]
            out[name] = y_pad[:, off : off + self._n_out[name]]
        return out


if __name__ == "__main__":
    root = jax.random.PRNGKey(0)
    k_params, k_x = jax.random.split(root)

    module = MyDictDense(k_params)

    # Small batch of inputs with in_features = 4 (matches torch.mm(x, (4, ...))).
    x = jax.random.normal(k_x, (2, 4), dtype=jnp.float32)

    # Per-choice calls — all hit the SAME compiled kernel (choice is a runtime int).
    y1 = module(x)                       # (2, 4)
    y2 = module(x, choice="linear2")     # (2, 1)
    y3 = module(x, choice="linear3")     # (2, 2)

    # Fused path: one launch for all three choices.
    y_all = module.forward_all(x)

    jax.block_until_ready((y1, y2, y3, y_all))

    # Sanity-check against plain-JAX reference.
    for y, name in ((y1, "linear1"), (y2, "linear2"), (y3, "linear3")):
        ref = x @ module.params[name]
        assert y.shape == ref.shape, name
        assert jnp.allclose(y, ref, atol=1e-5, rtol=1e-5), name
        assert jnp.allclose(y_all[name], ref, atol=1e-5, rtol=1e-5), name + "_fused"

    print("KERNEL_OK")
</pallas_src>

<mosaic_0001>
module attributes {stable_mosaic.version = 11 : i64} {
  func.func @_mm_kernel(%arg0: i32, %arg1: memref<1xi32, #tpu.memory_space<smem>>, %arg2: memref<8x8xf32, #tpu.memory_space<vmem>>, %arg3: memref<1x8x128xf32, #tpu.memory_space<vmem>>, %arg4: memref<8x128xf32, #tpu.memory_space<vmem>>) attributes {dimension_semantics = [#tpu.dimension_semantics<arbitrary>], iteration_bounds = array<i64: 1>, scalar_prefetch = 1 : i64, scratch_operands = 0 : i64, tpu.core_type = #tpu.core_type<tc>, window_params = [{pipeline_mode = #tpu.pipeline_mode<synchronous>, transform_indices = @transform_0, window_bounds = array<i64: 8, 8>}, {transform_indices = @transform_1, window_bounds = array<i64: 1, 8, 128>}, {pipeline_mode = #tpu.pipeline_mode<synchronous>, transform_indices = @transform_2, window_bounds = array<i64: 8, 128>}]} {
    %c0 = arith.constant 0 : index
    %c0_0 = arith.constant 0 : index
    %0 = vector.load %arg2[%c0, %c0_0] : memref<8x8xf32, #tpu.memory_space<vmem>>, vector<8x8xf32>
    %c0_1 = arith.constant 0 : index
    %c0_2 = arith.constant 0 : index
    %c0_3 = arith.constant 0 : index
    %1 = vector.load %arg3[%c0_1, %c0_2, %c0_3] : memref<1x8x128xf32, #tpu.memory_space<vmem>>, vector<1x8x128xf32>
    %2 = vector.shape_cast %1 : vector<1x8x128xf32> to vector<8x128xf32>
    %cst = arith.constant dense<0.000000e+00> : vector<8x128xf32>
    %3 = tpu.matmul %0, %2, %cst {dimension_numbers = #tpu.dot_dimension_numbers<[1], [0], [0], [1], [0, 0, 1, 1], [], []>} : vector<8x8xf32>, vector<8x128xf32>, vector<8x128xf32> -> vector<8x128xf32>
    %c0_4 = arith.constant 0 : index
    %c0_5 = arith.constant 0 : index
    %4 = vector.load %arg4[%c0_4, %c0_5] : memref<8x128xf32, #tpu.memory_space<vmem>>, vector<8x128xf32>
    tpu.vector_store %arg4[%c0_4, %c0_5], %3 {strides = array<i32>} : memref<8x128xf32, #tpu.memory_space<vmem>>, vector<8x128xf32>,
    return
  }
  func.func @transform_0(%arg0: i32, %arg1: memref<1xi32, #tpu.memory_space<smem>>) -> (i32, i32) {
    %c0_i32 = arith.constant 0 : i32
    %c0_i32_0 = arith.constant 0 : i32
    %c0_i32_1 = arith.constant 0 : i32
    return %c0_i32, %c0_i32_0 : i32, i32
  }
  func.func @transform_1(%arg0: i32, %arg1: memref<1xi32, #tpu.memory_space<smem>>) -> (i32, i32, i32) {
    %c0 = arith.constant 0 : index
    %0 = memref.load %arg1[%c0] : memref<1xi32, #tpu.memory_space<smem>>
    %c0_i32 = arith.constant 0 : i32
    %c0_i32_0 = arith.constant 0 : i32
    %c0_i32_1 = arith.constant 0 : i32
    return %0, %c0_i32, %c0_i32_0 : i32, i32, i32
  }
  func.func @transform_2(%arg0: i32, %arg1: memref<1xi32, #tpu.memory_space<smem>>) -> (i32, i32) {
    %c0_i32 = arith.constant 0 : i32
    %c0_i32_0 = arith.constant 0 : i32
    %c0_i32_1 = arith.constant 0 : i32
    return %c0_i32, %c0_i32_0 : i32, i32
  }
}

</mosaic_0001>

<llo_original>
// kernel: _packed_mm.1
$region0: #{_packed_mm.1}
  #allocation0 [shape = 'u32[]', space=smem, size = 0x4, offset = 0x4, fixed_abs, tag = 'smem constant byte address 0x4 - core index']
  #allocation1 [shape = 'u32[144,128]{1,0:T(1,128)}', space=vmem, size = 0x12000, scoped, tag = 'internal scratch']
  #allocation2 [shape = 's32[1]{0}', space=sflag, size = 0x4, scoped, tag = 'scoped memory for _packed_mm.1']
  #allocation3 [shape = 's32[1]{0:T(128)S(6)}', space=smem, size = 0x200, scoped, tag = 'prefetched SMEM operand 0']
  %s0 = inlined_call_operand.<no memory space> [shape: s32[1], index: 0, kind: input, shape index: {}]
  %s1 = inlined_call_operand.vmem [shape: f32[8,8], index: 1, kind: input, shape index: {}]
  %s2 = inlined_call_operand.hbm [shape: f32[4,8,128], index: 2, kind: input, shape index: {}]
  %s3 = inlined_call_operand.vmem [shape: f32[8,128], index: 3, kind: output, shape index: {}]
  %s4 = sld [smem:[#allocation0]]
  $region22: #{_packed_mm.1} parent=0
    _
  %s6 = ssub.s32 1, %s4
  %s7 = scalar_select 0, %s6, %s4
  %8 = sst [smem:[#allocation3]] %s0
  $region1: #{_packed_mm.1} parent=0
    #allocation4 [shape = 'u8[4096]{0}', space=vmem, size = 0x1000, scoped, tag = 'input window, operand 2, single buffered']
    #allocation5 [shape = 's32[1]{0}', space=sflag, size = 0x4, scoped, tag = 'scoped memory for _packed_mm.1']
    %9 = vsyncpa [#allocation5], 0
    // Predicated region
    $region2: #{_packed_mm.1} parent=1 // pred_check
      _
    $region3: #{_packed_mm.1} parent=1 // pred_check_branch
      %11 = sbr.rel (0) target = $region5
    $region4: #{_packed_mm.1} parent=1 // pred_region
      _
    $region5: #{_packed_mm.1} parent=1 // pred_fallthru
      _
    // Predicated region
    $region6: #{_packed_mm.1} parent=1 // pred_check
      _
    $region7: #{_packed_mm.1} parent=1 // pred_check_branch
      %13 = sbr.rel (0) target = $region9
    $region8: #{_packed_mm.1} parent=1 // pred_region
      %s14 = sld [smem:[#allocation3]]
      %s16 = ssub.s32 128, 128
      %17 = vsyncadd [#allocation5], %s16
      %s18 = smul.addr %s14, 128
      %s19 = scalar_lea.hbm %s2, %s18
      %s21 = sshll.u32 [#allocation4], 4
      %s22 = int_to_ptr.vmem [resolvable:$true] %s21
      %24 = dma.hbm_to_vmem [thread:$0]  %s19, 128, %s22, [#allocation5]
    $region9: #{_packed_mm.1} parent=1 // pred_fallthru
      _
    // Predicated region
    $region10: #{_packed_mm.1} parent=1 // pred_check
      _
    $region11: #{_packed_mm.1} parent=1 // pred_check_branch
      %26 = sbr.rel (0) target = $region13
    $region12: #{_packed_mm.1} parent=1 // pred_region
      %27 = dma.done [#allocation5], 128
    $region13: #{_packed_mm.1} parent=1 // pred_fallthru
      _
    %s28 = sld [smem:[#allocation3]]
    %v29 = vld [vmem:[%s1] sm:$0xff]
    %v30 = vld [vmem:[#allocation4] sm:$0xff]
    %vm31 = vcmask 64512
    %v33 = vsel %vm31, %v29, 0
    %35 = vmatprep.subr.mxu0 0.0
    %36 = vmatpush1.msra.mxu0 0.0
    %37 = vmatprep.subr.mxu0 0.0
    %38 = vmatpush1.msra.mxu0 0.0
    %39 = vmatprep.subr.mxu0 0.0
    %40 = vmatpush1.msra.mxu0 0.0
    %41 = vmatprep.subr.mxu0 0.0
    %42 = vmatpush1.msra.mxu0 0.0
    %43 = vmatprep.subr.mxu0 0.0
    %44 = vmatpush1.msra.mxu0 0.0
    %45 = vmatprep.subr.mxu0 0.0
    %46 = vmatpush1.msra.mxu0 0.0
    %47 = vmatprep.subr.mxu0 0.0
    %48 = vmatpush1.msra.mxu0 0.0
    %49 = vmatprep.subr.mxu0 0.0
    %50 = vmatpush1.msra.mxu0 0.0
    %51 = vmatprep.subr.mxu0 0.0
    %52 = vmatpush1.msra.mxu0 0.0
    %53 = vmatprep.subr.mxu0 0.0
    %54 = vmatpush1.msra.mxu0 0.0
    %55 = vmatprep.subr.mxu0 0.0
    %56 = vmatpush1.msra.mxu0 0.0
    %57 = vmatprep.subr.mxu0 0.0
    %58 = vmatpush1.msra.mxu0 0.0
    %59 = vmatprep.subr.mxu0 0.0
    %60 = vmatpush1.msra.mxu0 0.0
    %61 = vmatprep.subr.mxu0 0.0
    %62 = vmatpush1.msra.mxu0 0.0
    %63 = vmatprep.subr.mxu0 0.0
    %64 = vmatpush1.msra.mxu0 0.0
    %65 = vmatprep.subr.mxu0 0.0
    %66 = vmatpush1.msra.mxu0 %v30
    %67 = vmatprep.subr.mxu0 0.0
    %68 = vmatpush2.msra.mxu0 0.0
    %69 = vmatprep.subr.mxu0 0.0
    %70 = vmatpush2.msra.mxu0 0.0
    %71 = vmatprep.subr.mxu0 0.0
    %72 = vmatpush2.msra.mxu0 0.0
    %73 = vmatprep.subr.mxu0 0.0
    %74 = vmatpush2.msra.mxu0 0.0
    %75 = vmatprep.subr.mxu0 0.0
    %76 = vmatpush2.msra.mxu0 0.0
    %77 = vmatprep.subr.mxu0 0.0
    %78 = vmatpush2.msra.mxu0 0.0
    %79 = vmatprep.subr.mxu0 0.0
    %80 = vmatpush2.msra.mxu0 0.0
    %81 = vmatprep.subr.mxu0 0.0
    %82 = vmatpush2.msra.mxu0 0.0
    %83 = vmatprep.subr.mxu0 0.0
    %84 = vmatpush2.msra.mxu0 0.0
    %85 = vmatprep.subr.mxu0 0.0
    %86 = vmatpush2.msra.mxu0 0.0
    %87 = vmatprep.subr.mxu0 0.0
    %88 = vmatpush2.msra.mxu0 0.0
    %89 = vmatprep.subr.mxu0 0.0
    %90 = vmatpush2.msra.mxu0 0.0
    %91 = vmatprep.subr.mxu0 0.0
    %92 = vmatpush2.msra.mxu0 0.0
    %93 = vmatprep.subr.mxu0 0.0
    %94 = vmatpush2.msra.mxu0 0.0
    %95 = vmatprep.subr.mxu0 0.0
    %96 = vmatpush2.msra.mxu0 0.0
    %97 = vmatprep.subr.mxu0 0.0
    %98 = vmatpush2.msra.mxu0 0.0
    %99 = vmatprep.mubr.f32.mxu0 0.0
    %100 = vmatmul.mubr.f32.gmra.mxu0 %v33
    %v101 = vpop.f32.mrf.mxu0
    %v102 = vadd.f32 0.0, %v101
    %v103 = vpop.f32.mrf.mxu0
    %104 = vdwg.mxu0
    %105 = vst [vmem:[%s3] sm:$0xff] %v102
    // Predicated region
    $region14: #{_packed_mm.1} parent=1 // pred_check
      _
    $region15: #{_packed_mm.1} parent=1 // pred_check_branch
      %107 = sbr.rel (0) target = $region17
    $region16: #{_packed_mm.1} parent=1 // pred_region
      _
    $region17: #{_packed_mm.1} parent=1 // pred_fallthru
      _
    // Predicated region
    $region18: #{_packed_mm.1} parent=1 // pred_check
      _
    $region19: #{_packed_mm.1} parent=1 // pred_check_branch
      %109 = sbr.rel (0) target = $region21
    $region20: #{_packed_mm.1} parent=1 // pred_region
      _
    $region21: #{_packed_mm.1} parent=1 // pred_fallthru
      _
    %110 = vsyncpa [#allocation5], 1

</llo_original>
